<compile_context>
chip_gen: v6e
topology: v6e:2x2x1
jax: 0.10.0
libtpu: 0.0.40
codegen_flags: <defaults>
</compile_context>

<pallas_src>
from functools import partial

import jax
import jax.numpy as jnp
from jax import lax
from jax.experimental import pallas as pl
from jax.experimental.pallas import tpu as pltpu  # noqa: F401  (TPU backend)


def head_kernel(x_ref, w_ref, o_ref, *, batch, tokens, head_size):
    # x_ref: [B*T, C] (flattened), w_ref: [C, 3H] fused (scale folded into Wq),
    # o_ref: [B, T, H]
    T, H = tokens, head_size

    # Single fused projection on the MXU: [B*T, C] @ [C, 3H] -> [B*T, 3H]
    qkv = jnp.dot(x_ref[...], w_ref[...], preferred_element_type=jnp.float32)

    # Causal mask built once, reused across the (unrolled) batch loop.
    row = lax.broadcasted_iota(jnp.int32, (T, T), 0)
    col = lax.broadcasted_iota(jnp.int32, (T, T), 1)
    causal = col <= row
    neg_big = jnp.float32(-1e30)  # finite "masked" value (NaN-safe vs -inf)

    for b in range(batch):  # static unroll; batch is tiny for this module
        blk = qkv[b * T:(b + 1) * T, :]          # [T, 3H]
        q = blk[:, 0 * H:1 * H]                  # scale pre-folded into Wq
        k = blk[:, 1 * H:2 * H]
        v = blk[:, 2 * H:3 * H]

        # scores[i, j] = sum_h q[i,h] * k[j,h]  (no explicit transpose of k)
        scores = lax.dot_general(
            q, k, (((1,), (1,)), ((), ())),
            preferred_element_type=jnp.float32)   # [T, T]
        scores = jnp.where(causal, scores, neg_big)

        # numerically stable softmax, normalization deferred past the PV matmul
        m = jnp.max(scores, axis=-1, keepdims=True)
        p = jnp.exp(scores - m)                   # [T, T] unnormalized probs
        l = jnp.sum(p, axis=-1, keepdims=True)    # [T, 1]

        acc = jnp.dot(p, v, preferred_element_type=jnp.float32)   # [T, H]
        out = acc * pl.reciprocal(l, approx=False)                 # [T, H]

        o_ref[b] = out.astype(o_ref.dtype)


def head_forward(x, wk, wq, wv):
    """x: [B, T, C]; wk/wq/wv: nn.Linear weights of shape [H, C]."""
    B, T, C = x.shape
    H = wk.shape[0]
    scale = float(H) ** -0.5

    # Wrapper-side (plain JAX) glue: fold the softmax scale into Wq and fuse
    # the three projection weights into one [C, 3H] matrix: [q | k | v].
    w_fused = jnp.concatenate([wq.T * scale, wk.T, wv.T], axis=1)  # [C, 3H]
    x2d = x.reshape(B * T, C)

    kernel = partial(head_kernel, batch=B, tokens=T, head_size=H)

    return pl.pallas_call(
        kernel,
        out_shape=jax.ShapeDtypeStruct((B, T, H), x.dtype),
        grid=(1,),  # single grid step: whole problem fits VMEM at these sizes
        in_specs=[
            pl.BlockSpec((B * T, C), lambda i: (0, 0)),      # flattened x
            pl.BlockSpec((C, 3 * H), lambda i: (0, 0)),      # fused weights
        ],
        out_specs=pl.BlockSpec((B, T, H), lambda i: (0, 0, 0)),
    )(x2d, w_fused)


def head_reference(x, wk, wq, wv):
    """Pure-JAX reference matching the PyTorch forward (eval mode)."""
    k = jnp.einsum("btc,hc->bth", x, wk)
    q = jnp.einsum("btc,hc->bth", x, wq)
    v = jnp.einsum("btc,hc->bth", x, wv)
    scale = k.shape[-1] ** -0.5
    scores = jnp.einsum("bth,bsh->bts", q, k) * scale
    T = x.shape[1]
    tril = jnp.tril(jnp.ones((T, T), dtype=bool))
    scores = jnp.where(tril[None, :, :], scores, -jnp.inf)
    attn = jax.nn.softmax(scores, axis=-1)
    return jnp.einsum("bts,bsh->bth", attn, v)


if __name__ == "__main__":
    # Module hyperparameters (small, deterministic)
    B, T = 2, 8                 # batch, tokens (T == blockSize)
    embeddingDims = 32          # C
    headSize = 16               # H
    blockSize = T
    dropout = 0.0               # identity in this kernel (eval mode)

    key = jax.random.PRNGKey(0)
    kx, kk, kq, kv = jax.random.split(key, 4)

    x = jax.random.normal(kx, (B, T, embeddingDims), dtype=jnp.float32)
    # nn.Linear(embeddingDims, headSize) weight shape: [headSize, embeddingDims]
    wk = jax.random.normal(kk, (headSize, embeddingDims), dtype=jnp.float32) * 0.1
    wq = jax.random.normal(kq, (headSize, embeddingDims), dtype=jnp.float32) * 0.1
    wv = jax.random.normal(kv, (headSize, embeddingDims), dtype=jnp.float32) * 0.1

    out = head_forward(x, wk, wq, wv)
    out = jax.block_until_ready(out)

    ref = head_reference(x, wk, wq, wv)
    assert out.shape == (B, T, headSize), out.shape
    assert jnp.allclose(out, ref, atol=1e-4, rtol=1e-4), "mismatch vs reference"

    print("KERNEL_OK")
</pallas_src>

<mosaic_0001>
module attributes {stable_mosaic.version = 11 : i64} {
  func.func @head_kernel(%arg0: i32, %arg1: memref<16x32xf32, #tpu.memory_space<vmem>>, %arg2: memref<32x48xf32, #tpu.memory_space<vmem>>, %arg3: memref<2x8x16xf32, #tpu.memory_space<vmem>>) attributes {dimension_semantics = [#tpu.dimension_semantics<arbitrary>], iteration_bounds = array<i64: 1>, scalar_prefetch = 0 : i64, scratch_operands = 0 : i64, tpu.core_type = #tpu.core_type<tc>, window_params = [{pipeline_mode = #tpu.pipeline_mode<synchronous>, transform_indices = @transform_0, window_bounds = array<i64: 16, 32>}, {pipeline_mode = #tpu.pipeline_mode<synchronous>, transform_indices = @transform_1, window_bounds = array<i64: 32, 48>}, {pipeline_mode = #tpu.pipeline_mode<synchronous>, transform_indices = @transform_2, window_bounds = array<i64: 2, 8, 16>}]} {
    %c0 = arith.constant 0 : index
    %c0_0 = arith.constant 0 : index
    %0 = vector.load %arg1[%c0, %c0_0] : memref<16x32xf32, #tpu.memory_space<vmem>>, vector<16x32xf32>
    %c0_1 = arith.constant 0 : index
    %c0_2 = arith.constant 0 : index
    %1 = vector.load %arg2[%c0_1, %c0_2] : memref<32x48xf32, #tpu.memory_space<vmem>>, vector<32x48xf32>
    %cst = arith.constant dense<0.000000e+00> : vector<16x48xf32>
    %2 = tpu.matmul %0, %1, %cst {dimension_numbers = #tpu.dot_dimension_numbers<[1], [0], [0], [1], [0, 0, 1, 1], [], []>} : vector<16x32xf32>, vector<32x48xf32>, vector<16x48xf32> -> vector<16x48xf32>
    %3 = tpu.iota {dimensions = array<i32: 0>} : vector<8x8xi32>
    %4 = tpu.iota {dimensions = array<i32: 1>} : vector<8x8xi32>
    %5 = arith.cmpi sle, %4, %3 : vector<8x8xi32>
    %6 = vector.extract_strided_slice %2 {offsets = [0, 0], sizes = [8, 48], strides = [1, 1]} : vector<16x48xf32> to vector<8x48xf32>
    %7 = vector.extract_strided_slice %6 {offsets = [0, 0], sizes = [8, 16], strides = [1, 1]} : vector<8x48xf32> to vector<8x16xf32>
    %8 = vector.extract_strided_slice %6 {offsets = [0, 16], sizes = [8, 16], strides = [1, 1]} : vector<8x48xf32> to vector<8x16xf32>
    %9 = vector.extract_strided_slice %6 {offsets = [0, 32], sizes = [8, 16], strides = [1, 1]} : vector<8x48xf32> to vector<8x16xf32>
    %cst_3 = arith.constant dense<0.000000e+00> : vector<8x8xf32>
    %10 = tpu.matmul %7, %8, %cst_3 {dimension_numbers = #tpu.dot_dimension_numbers<[1], [1], [0], [0], [0, 0, 1, 0], [], []>} : vector<8x16xf32>, vector<8x16xf32>, vector<8x8xf32> -> vector<8x8xf32>
    %cst_4 = arith.constant -1.000000e+30 : f32
    %11 = vector.broadcast %cst_4 : f32 to vector<8x8xf32>
    %12 = arith.select %5, %10, %11 : vector<8x8xi1>, vector<8x8xf32>
    %cst_5 = arith.constant dense<0xFF800000> : vector<8xf32>
    %13 = vector.multi_reduction <maximumf>, %12, %cst_5 [1] : vector<8x8xf32> to vector<8xf32>
    %14 = vector.shape_cast %13 : vector<8xf32> to vector<8x1xf32>
    %15 = vector.broadcast %14 : vector<8x1xf32> to vector<8x8xf32>
    %16 = arith.subf %12, %15 : vector<8x8xf32>
    %17 = math.exp %16 : vector<8x8xf32>
    %cst_6 = arith.constant dense<0.000000e+00> : vector<8xf32>
    %18 = vector.multi_reduction <add>, %17, %cst_6 [1] : vector<8x8xf32> to vector<8xf32>
    %19 = vector.shape_cast %18 : vector<8xf32> to vector<8x1xf32>
    %cst_7 = arith.constant dense<0.000000e+00> : vector<8x16xf32>
    %20 = tpu.matmul %17, %9, %cst_7 {dimension_numbers = #tpu.dot_dimension_numbers<[1], [0], [0], [1], [0, 0, 1, 1], [], []>} : vector<8x8xf32>, vector<8x16xf32>, vector<8x16xf32> -> vector<8x16xf32>
    %21 = tpu.reciprocal %19 : vector<8x1xf32> -> vector<8x1xf32>
    %22 = vector.broadcast %21 : vector<8x1xf32> to vector<8x16xf32>
    %23 = arith.mulf %20, %22 : vector<8x16xf32>
    %c0_8 = arith.constant 0 : index
    %c0_9 = arith.constant 0 : index
    %c0_10 = arith.constant 0 : index
    %24 = vector.load %arg3[%c0_8, %c0_9, %c0_10] : memref<2x8x16xf32, #tpu.memory_space<vmem>>, vector<1x8x16xf32>
    %25 = vector.shape_cast %24 : vector<1x8x16xf32> to vector<8x16xf32>
    %26 = vector.shape_cast %23 : vector<8x16xf32> to vector<1x8x16xf32>
    tpu.vector_store %arg3[%c0_8, %c0_9, %c0_10], %26 {strides = array<i32>} : memref<2x8x16xf32, #tpu.memory_space<vmem>>, vector<1x8x16xf32>,
    %27 = vector.extract_strided_slice %2 {offsets = [8, 0], sizes = [8, 48], strides = [1, 1]} : vector<16x48xf32> to vector<8x48xf32>
    %28 = vector.extract_strided_slice %27 {offsets = [0, 0], sizes = [8, 16], strides = [1, 1]} : vector<8x48xf32> to vector<8x16xf32>
    %29 = vector.extract_strided_slice %27 {offsets = [0, 16], sizes = [8, 16], strides = [1, 1]} : vector<8x48xf32> to vector<8x16xf32>
    %30 = vector.extract_strided_slice %27 {offsets = [0, 32], sizes = [8, 16], strides = [1, 1]} : vector<8x48xf32> to vector<8x16xf32>
    %cst_11 = arith.constant dense<0.000000e+00> : vector<8x8xf32>
    %31 = tpu.matmul %28, %29, %cst_11 {dimension_numbers = #tpu.dot_dimension_numbers<[1], [1], [0], [0], [0, 0, 1, 0], [], []>} : vector<8x16xf32>, vector<8x16xf32>, vector<8x8xf32> -> vector<8x8xf32>
    %cst_12 = arith.constant -1.000000e+30 : f32
    %32 = vector.broadcast %cst_12 : f32 to vector<8x8xf32>
    %33 = arith.select %5, %31, %32 : vector<8x8xi1>, vector<8x8xf32>
    %cst_13 = arith.constant dense<0xFF800000> : vector<8xf32>
    %34 = vector.multi_reduction <maximumf>, %33, %cst_13 [1] : vector<8x8xf32> to vector<8xf32>
    %35 = vector.shape_cast %34 : vector<8xf32> to vector<8x1xf32>
    %36 = vector.broadcast %35 : vector<8x1xf32> to vector<8x8xf32>
    %37 = arith.subf %33, %36 : vector<8x8xf32>
    %38 = math.exp %37 : vector<8x8xf32>
    %cst_14 = arith.constant dense<0.000000e+00> : vector<8xf32>
    %39 = vector.multi_reduction <add>, %38, %cst_14 [1] : vector<8x8xf32> to vector<8xf32>
    %40 = vector.shape_cast %39 : vector<8xf32> to vector<8x1xf32>
    %cst_15 = arith.constant dense<0.000000e+00> : vector<8x16xf32>
    %41 = tpu.matmul %38, %30, %cst_15 {dimension_numbers = #tpu.dot_dimension_numbers<[1], [0], [0], [1], [0, 0, 1, 1], [], []>} : vector<8x8xf32>, vector<8x16xf32>, vector<8x16xf32> -> vector<8x16xf32>
    %42 = tpu.reciprocal %40 : vector<8x1xf32> -> vector<8x1xf32>
    %43 = vector.broadcast %42 : vector<8x1xf32> to vector<8x16xf32>
    %44 = arith.mulf %41, %43 : vector<8x16xf32>
    %c1 = arith.constant 1 : index
    %c0_16 = arith.constant 0 : index
    %c0_17 = arith.constant 0 : index
    %45 = vector.load %arg3[%c1, %c0_16, %c0_17] : memref<2x8x16xf32, #tpu.memory_space<vmem>>, vector<1x8x16xf32>
    %46 = vector.shape_cast %45 : vector<1x8x16xf32> to vector<8x16xf32>
    %47 = vector.shape_cast %44 : vector<8x16xf32> to vector<1x8x16xf32>
    tpu.vector_store %arg3[%c1, %c0_16, %c0_17], %47 {strides = array<i32>} : memref<2x8x16xf32, #tpu.memory_space<vmem>>, vector<1x8x16xf32>,
    return
  }
  func.func @transform_0(%arg0: i32) -> (i32, i32) {
    %c0_i32 = arith.constant 0 : i32
    %c0_i32_0 = arith.constant 0 : i32
    %c0_i32_1 = arith.constant 0 : i32
    return %c0_i32, %c0_i32_0 : i32, i32
  }
  func.func @transform_1(%arg0: i32) -> (i32, i32) {
    %c0_i32 = arith.constant 0 : i32
    %c0_i32_0 = arith.constant 0 : i32
    %c0_i32_1 = arith.constant 0 : i32
    return %c0_i32, %c0_i32_0 : i32, i32
  }
  func.func @transform_2(%arg0: i32) -> (i32, i32, i32) {
    %c0_i32 = arith.constant 0 : i32
    %c0_i32_0 = arith.constant 0 : i32
    %c0_i32_1 = arith.constant 0 : i32
    %c0_i32_2 = arith.constant 0 : i32
    return %c0_i32, %c0_i32_0, %c0_i32_1 : i32, i32, i32
  }
}

</mosaic_0001>

<llo_original>
// kernel: tpu_custom_call.1
$region0: #{tpu_custom_call.1}
  #allocation0 [shape = 'u32[]', space=smem, size = 0x4, offset = 0x4, fixed_abs, tag = 'smem constant byte address 0x4 - core index']
  #allocation1 [shape = 'u32[144,128]{1,0:T(1,128)}', space=vmem, size = 0x12000, scoped, tag = 'internal scratch']
  %s0 = inlined_call_operand.hbm [shape: f32[16,32], index: 0, kind: input, shape index: {}]
  %s1 = inlined_call_operand.hbm [shape: f32[32,48], index: 1, kind: input, shape index: {}]
  %s2 = inlined_call_operand.hbm [shape: f32[2,8,16], index: 2, kind: output, shape index: {}]
  %s3 = sld [smem:[#allocation0]]
  $region26: #{tpu_custom_call.1} parent=0
    _
  %s5 = ssub.s32 1, %s3
  %s6 = scalar_select 0, %s5, %s3
  $region1: #{tpu_custom_call.1} parent=0
    #allocation2 [shape = 'u8[8192]{0}', space=vmem, size = 0x2000, scoped, tag = 'input window, operand 0, single buffered']
    #allocation3 [shape = 's32[1]{0}', space=sflag, size = 0x4, scoped, tag = 'scoped memory for tpu_custom_call.1']
    #allocation4 [shape = 's32[1]{0}', space=sflag, size = 0x4, scoped, tag = 'scoped memory for tpu_custom_call.1']
    #allocation5 [shape = 'u8[16384]{0}', space=vmem, size = 0x4000, scoped, tag = 'input window, operand 1, single buffered']
    #allocation6 [shape = 's32[1]{0}', space=sflag, size = 0x4, scoped, tag = 'scoped memory for tpu_custom_call.1']
    #allocation7 [shape = 'u8[8192]{0}', space=vmem, size = 0x2000, scoped, tag = 'output window, operand 0, single buffered']
    %7 = vsyncpa [#allocation3], 0
    %8 = vsyncpa [#allocation6], 0
    %9 = vsyncpa [#allocation4], 0
    // Predicated region
    $region2: #{tpu_custom_call.1} parent=1 // pred_check
      _
    $region3: #{tpu_custom_call.1} parent=1 // pred_check_branch
      %11 = sbr.rel (0) target = $region5
    $region4: #{tpu_custom_call.1} parent=1 // pred_region
      %s13 = ssub.s32 256, 256
      %14 = vsyncadd [#allocation3], %s13
      %s15 = sshll.u32 [#allocation2], 4
      %s16 = int_to_ptr.vmem [resolvable:$true] %s15
      %21 = dma.hbm_to_vmem [thread:$0]  %s0, 256, %s16, [#allocation3], 128, 128, 8
    $region5: #{tpu_custom_call.1} parent=1 // pred_fallthru
      _
    // Predicated region
    $region6: #{tpu_custom_call.1} parent=1 // pred_check
      _
    $region7: #{tpu_custom_call.1} parent=1 // pred_check_branch
      %23 = sbr.rel (0) target = $region9
    $region8: #{tpu_custom_call.1} parent=1 // pred_region
      %s25 = ssub.s32 512, 512
      %26 = vsyncadd [#allocation6], %s25
      %s27 = sshll.u32 [#allocation5], 4
      %s28 = int_to_ptr.vmem [resolvable:$true] %s27
      %33 = dma.hbm_to_vmem [thread:$0]  %s1, 512, %s28, [#allocation6], 128, 128, 8
    $region9: #{tpu_custom_call.1} parent=1 // pred_fallthru
      _
    // Predicated region
    $region10: #{tpu_custom_call.1} parent=1 // pred_check
      _
    $region11: #{tpu_custom_call.1} parent=1 // pred_check_branch
      %35 = sbr.rel (0) target = $region13
    $region12: #{tpu_custom_call.1} parent=1 // pred_region
      %36 = dma.done [#allocation3], 256
    $region13: #{tpu_custom_call.1} parent=1 // pred_fallthru
      _
    // Predicated region
    $region14: #{tpu_custom_call.1} parent=1 // pred_check
      _
    $region15: #{tpu_custom_call.1} parent=1 // pred_check_branch
      %38 = sbr.rel (0) target = $region17
    $region16: #{tpu_custom_call.1} parent=1 // pred_region
      %39 = dma.done [#allocation6], 512
    $region17: #{tpu_custom_call.1} parent=1 // pred_fallthru
      _
    %v40 = vld [vmem:[#allocation2] sm:$0xff]
    %v41 = vld [vmem:[#allocation2 + $0x8] sm:$0xff]
    %v42 = vld [vmem:[#allocation5] sm:$0xff]
    %v43 = vld [vmem:[#allocation5 + $0x8] sm:$0xff]
    %v44 = vld [vmem:[#allocation5 + $0x10] sm:$0xff]
    %v45 = vld [vmem:[#allocation5 + $0x18] sm:$0xff]
    %vm46 = vcmask 261120
    %v48 = vsel %vm46, %v40, 0
    %v51 = vsel %vm46, %v41, 0
    %53 = vmatprep.subr.mxu0 0.0
    %54 = vmatpush1.msra.mxu0 0.0
    %55 = vmatprep.subr.mxu0 0.0
    %56 = vmatpush1.msra.mxu0 0.0
    %57 = vmatprep.subr.mxu0 0.0
    %58 = vmatpush1.msra.mxu0 0.0
    %59 = vmatprep.subr.mxu0 0.0
    %60 = vmatpush1.msra.mxu0 0.0
    %61 = vmatprep.subr.mxu0 0.0
    %62 = vmatpush1.msra.mxu0 0.0
    %63 = vmatprep.subr.mxu0 0.0
    %64 = vmatpush1.msra.mxu0 0.0
    %65 = vmatprep.subr.mxu0 0.0
    %66 = vmatpush1.msra.mxu0 0.0
    %67 = vmatprep.subr.mxu0 0.0
    %68 = vmatpush1.msra.mxu0 0.0
    %69 = vmatprep.subr.mxu0 0.0
    %70 = vmatpush1.msra.mxu0 0.0
    %71 = vmatprep.subr.mxu0 0.0
    %72 = vmatpush1.msra.mxu0 0.0
    %73 = vmatprep.subr.mxu0 0.0
    %74 = vmatpush1.msra.mxu0 0.0
    %75 = vmatprep.subr.mxu0 0.0
    %76 = vmatpush1.msra.mxu0 0.0
    %77 = vmatprep.subr.mxu0 0.0
    %78 = vmatpush1.msra.mxu0 %v45
    %79 = vmatprep.subr.mxu0 0.0
    %80 = vmatpush1.msra.mxu0 %v44
    %81 = vmatprep.subr.mxu0 0.0
    %82 = vmatpush1.msra.mxu0 %v43
    %83 = vmatprep.subr.mxu0 0.0
    %84 = vmatpush1.msra.mxu0 %v42
    %85 = vmatprep.subr.mxu0 0.0
    %86 = vmatpush2.msra.mxu0 0.0
    %87 = vmatprep.subr.mxu0 0.0
    %88 = vmatpush2.msra.mxu0 0.0
    %89 = vmatprep.subr.mxu0 0.0
    %90 = vmatpush2.msra.mxu0 0.0
    %91 = vmatprep.subr.mxu0 0.0
    %92 = vmatpush2.msra.mxu0 0.0
    %93 = vmatprep.subr.mxu0 0.0
    %94 = vmatpush2.msra.mxu0 0.0
    %95 = vmatprep.subr.mxu0 0.0
    %96 = vmatpush2.msra.mxu0 0.0
    %97 = vmatprep.subr.mxu0 0.0
    %98 = vmatpush2.msra.mxu0 0.0
    %99 = vmatprep.subr.mxu0 0.0
    %100 = vmatpush2.msra.mxu0 0.0
    %101 = vmatprep.subr.mxu0 0.0
    %102 = vmatpush2.msra.mxu0 0.0
    %103 = vmatprep.subr.mxu0 0.0
    %104 = vmatpush2.msra.mxu0 0.0
    %105 = vmatprep.subr.mxu0 0.0
    %106 = vmatpush2.msra.mxu0 0.0
    %107 = vmatprep.subr.mxu0 0.0
    %108 = vmatpush2.msra.mxu0 0.0
    %109 = vmatprep.subr.mxu0 0.0
    %110 = vmatpush2.msra.mxu0 0.0
    %111 = vmatprep.subr.mxu0 0.0
    %112 = vmatpush2.msra.mxu0 0.0
    %113 = vmatprep.subr.mxu0 0.0
    %114 = vmatpush2.msra.mxu0 0.0
    %115 = vmatprep.subr.mxu0 0.0
    %116 = vmatpush2.msra.mxu0 0.0
    %117 = vmatprep.mubr.f32.mxu0 0.0
    %118 = vmatmul.mubr.f32.gmra.mxu0 %v48
    %v119 = vpop.f32.mrf.mxu0
    %v120 = vadd.f32 0.0, %v119
    %v121 = vpop.f32.mrf.mxu0
    %122 = vmatprep.mubr.f32.mxu0 0.0
    %123 = vmatmul.mubr.f32.gmra.mxu0 %v51
    %v124 = vpop.f32.mrf.mxu0
    %v125 = vadd.f32 0.0, %v124
    %v126 = vpop.f32.mrf.mxu0
    %127 = vdwg.mxu0
    %v128 = vlaneseq
    %v129 = vshrl.u32 %v128, 7
    %v130 = vlaneseq
    %v131 = vand.u32 %v130, 127
    %vm132 = vcmp.le.s32.totalorder %v131, %v129
    %134 = vrot.lane.b32.xlu0 %v120, 112
    %v135 = vpop.permute.xlu0 %134
    %vm136 = vcmask 130048
    %v137 = vsel %vm136, %v120, 0
    %v139 = vsel %vm136, %v135, 0
    %141 = vmatprep.subr.mxu0 0.0
    %142 = vmatpush1.xpose.msra.mxu0 0.0
    %143 = vmatprep.subr.mxu0 0.0
    %144 = vmatpush1.xpose.msra.mxu0 0.0
    %145 = vmatprep.subr.mxu0 0.0
    %146 = vmatpush1.xpose.msra.mxu0 0.0
    %147 = vmatprep.subr.mxu0 0.0
    %148 = vmatpush1.xpose.msra.mxu0 0.0
    %149 = vmatprep.subr.mxu0 0.0
    %150 = vmatpush1.xpose.msra.mxu0 0.0
    %151 = vmatprep.subr.mxu0 0.0
    %152 = vmatpush1.xpose.msra.mxu0 0.0
    %153 = vmatprep.subr.mxu0 0.0
    %154 = vmatpush1.xpose.msra.mxu0 0.0
    %155 = vmatprep.subr.mxu0 0.0
    %156 = vmatpush1.xpose.msra.mxu0 0.0
    %157 = vmatprep.subr.mxu0 0.0
    %158 = vmatpush1.xpose.msra.mxu0 0.0
    %159 = vmatprep.subr.mxu0 0.0
    %160 = vmatpush1.xpose.msra.mxu0 0.0
    %161 = vmatprep.subr.mxu0 0.0
    %162 = vmatpush1.xpose.msra.mxu0 0.0
    %163 = vmatprep.subr.mxu0 0.0
    %164 = vmatpush1.xpose.msra.mxu0 0.0
    %165 = vmatprep.subr.mxu0 0.0
    %166 = vmatpush1.xpose.msra.mxu0 0.0
    %167 = vmatprep.subr.mxu0 0.0
    %168 = vmatpush1.xpose.msra.mxu0 0.0
    %169 = vmatprep.subr.mxu0 0.0
    %170 = vmatpush1.xpose.msra.mxu0 0.0
    %171 = vmatprep.subr.mxu0 0.0
    %172 = vmatpush1.xpose.msra.mxu0 %v139
    %173 = vmatprep.subr.mxu0 0.0
    %174 = vmatpush2.xpose.msra.mxu0 0.0
    %175 = vmatprep.subr.mxu0 0.0
    %176 = vmatpush2.xpose.msra.mxu0 0.0
    %177 = vmatprep.subr.mxu0 0.0
    %178 = vmatpush2.xpose.msra.mxu0 0.0
    %179 = vmatprep.subr.mxu0 0.0
    %180 = vmatpush2.xpose.msra.mxu0 0.0
    %181 = vmatprep.subr.mxu0 0.0
    %182 = vmatpush2.xpose.msra.mxu0 0.0
    %183 = vmatprep.subr.mxu0 0.0
    %184 = vmatpush2.xpose.msra.mxu0 0.0
    %185 = vmatprep.subr.mxu0 0.0
    %186 = vmatpush2.xpose.msra.mxu0 0.0
    %187 = vmatprep.subr.mxu0 0.0
    %188 = vmatpush2.xpose.msra.mxu0 0.0
    %189 = vmatprep.subr.mxu0 0.0
    %190 = vmatpush2.xpose.msra.mxu0 0.0
    %191 = vmatprep.subr.mxu0 0.0
    %192 = vmatpush2.xpose.msra.mxu0 0.0
    %193 = vmatprep.subr.mxu0 0.0
    %194 = vmatpush2.xpose.msra.mxu0 0.0
    %195 = vmatprep.subr.mxu0 0.0
    %196 = vmatpush2.xpose.msra.mxu0 0.0
    %197 = vmatprep.subr.mxu0 0.0
    %198 = vmatpush2.xpose.msra.mxu0 0.0
    %199 = vmatprep.subr.mxu0 0.0
    %200 = vmatpush2.xpose.msra.mxu0 0.0
    %201 = vmatprep.subr.mxu0 0.0
    %202 = vmatpush2.xpose.msra.mxu0 0.0
    %203 = vmatprep.subr.mxu0 0.0
    %204 = vmatpush2.xpose.msra.mxu0 0.0
    %205 = vmatprep.mubr.f32.mxu0 0.0
    %206 = vmatmul.mubr.f32.gmra.mxu0 %v137
    %v207 = vpop.f32.mrf.mxu0
    %v208 = vadd.f32 0.0, %v207
    %v209 = vpop.f32.mrf.mxu0
    %210 = vdwg.mxu0
    %v211 = vsel %vm132, %v208, -1e+30
    %vm212 = vcmask 64512
    %v213 = vsel %vm212, %v211, -inf
    %214 = vmax.xlane.f32.xlu0 %v213
    %v215 = vpop.xlane.xlu0 %214
    %v216 = vsub.f32 %v211, %v215
    %v217 = vmul.f32 %v216, 1.442695
    %v218 = vpow.pop %v217
    %v219 = vsel %vm212, %v218, 0.0
    %220 = vadd.xlane.f32.xlu0 %v219
    %v221 = vpop.xlane.xlu0 %220
    %222 = vrot.lane.b32.xlu0 %v120, 96
    %v223 = vpop.permute.xlu0 %222
    %v226 = vsel %vm212, %v218, 0
    %228 = vmatprep.subr.mxu0 0.0
    %229 = vmatpush1.msra.mxu0 0.0
    %230 = vmatprep.subr.mxu0 0.0
    %231 = vmatpush1.msra.mxu0 0.0
    %232 = vmatprep.subr.mxu0 0.0
    %233 = vmatpush1.msra.mxu0 0.0
    %234 = vmatprep.subr.mxu0 0.0
    %235 = vmatpush1.msra.mxu0 0.0
    %236 = vmatprep.subr.mxu0 0.0
    %237 = vmatpush1.msra.mxu0 0.0
    %238 = vmatprep.subr.mxu0 0.0
    %239 = vmatpush1.msra.mxu0 0.0
    %240 = vmatprep.subr.mxu0 0.0
    %241 = vmatpush1.msra.mxu0 0.0
    %242 = vmatprep.subr.mxu0 0.0
    %243 = vmatpush1.msra.mxu0 0.0
    %244 = vmatprep.subr.mxu0 0.0
    %245 = vmatpush1.msra.mxu0 0.0
    %246 = vmatprep.subr.mxu0 0.0
    %247 = vmatpush1.msra.mxu0 0.0
    %248 = vmatprep.subr.mxu0 0.0
    %249 = vmatpush1.msra.mxu0 0.0
    %250 = vmatprep.subr.mxu0 0.0
    %251 = vmatpush1.msra.mxu0 0.0
    %252 = vmatprep.subr.mxu0 0.0
    %253 = vmatpush1.msra.mxu0 0.0
    %254 = vmatprep.subr.mxu0 0.0
    %255 = vmatpush1.msra.mxu0 0.0
    %256 = vmatprep.subr.mxu0 0.0
    %257 = vmatpush1.msra.mxu0 0.0
    %258 = vmatprep.subr.mxu0 0.0
    %259 = vmatpush1.msra.mxu0 %v223
    %260 = vmatprep.subr.mxu0 0.0
    %261 = vmatpush2.msra.mxu0 0.0
    %262 = vmatprep.subr.mxu0 0.0
    %263 = vmatpush2.msra.mxu0 0.0
    %264 = vmatprep.subr.mxu0 0.0
    %265 = vmatpush2.msra.mxu0 0.0
    %266 = vmatprep.subr.mxu0 0.0
    %267 = vmatpush2.msra.mxu0 0.0
    %268 = vmatprep.subr.mxu0 0.0
    %269 = vmatpush2.msra.mxu0 0.0
    %270 = vmatprep.subr.mxu0 0.0
    %271 = vmatpush2.msra.mxu0 0.0
    %272 = vmatprep.subr.mxu0 0.0
    %273 = vmatpush2.msra.mxu0 0.0
    %274 = vmatprep.subr.mxu0 0.0
    %275 = vmatpush2.msra.mxu0 0.0
    %276 = vmatprep.subr.mxu0 0.0
    %277 = vmatpush2.msra.mxu0 0.0
    %278 = vmatprep.subr.mxu0 0.0
    %279 = vmatpush2.msra.mxu0 0.0
    %280 = vmatprep.subr.mxu0 0.0
    %281 = vmatpush2.msra.mxu0 0.0
    %282 = vmatprep.subr.mxu0 0.0
    %283 = vmatpush2.msra.mxu0 0.0
    %284 = vmatprep.subr.mxu0 0.0
    %285 = vmatpush2.msra.mxu0 0.0
    %286 = vmatprep.subr.mxu0 0.0
    %287 = vmatpush2.msra.mxu0 0.0
    %288 = vmatprep.subr.mxu0 0.0
    %289 = vmatpush2.msra.mxu0 0.0
    %290 = vmatprep.subr.mxu0 0.0
    %291 = vmatpush2.msra.mxu0 0.0
    %292 = vmatprep.mubr.f32.mxu0 0.0
    %293 = vmatmul.mubr.f32.gmra.mxu0 %v226
    %v294 = vpop.f32.mrf.mxu0
    %v295 = vadd.f32 0.0, %v294
    %v296 = vpop.f32.mrf.mxu0
    %297 = vdwg.mxu0
    %v298 = vrcp.pop %v221
    %v299 = vmul.f32 %v295, %v298
    %300 = vst.msk [vmem:[#allocation7] sm:$0xff] %vm136, %v299
    %302 = vrot.lane.b32.xlu0 %v125, 112
    %v303 = vpop.permute.xlu0 %302
    %v304 = vsel %vm136, %v125, 0
    %v306 = vsel %vm136, %v303, 0
    %308 = vmatprep.subr.mxu0 0.0
    %309 = vmatpush1.xpose.msra.mxu0 0.0
    %310 = vmatprep.subr.mxu0 0.0
    %311 = vmatpush1.xpose.msra.mxu0 0.0
    %312 = vmatprep.subr.mxu0 0.0
    %313 = vmatpush1.xpose.msra.mxu0 0.0
    %314 = vmatprep.subr.mxu0 0.0
    %315 = vmatpush1.xpose.msra.mxu0 0.0
    %316 = vmatprep.subr.mxu0 0.0
    %317 = vmatpush1.xpose.msra.mxu0 0.0
    %318 = vmatprep.subr.mxu0 0.0
    %319 = vmatpush1.xpose.msra.mxu0 0.0
    %320 = vmatprep.subr.mxu0 0.0
    %321 = vmatpush1.xpose.msra.mxu0 0.0
    %322 = vmatprep.subr.mxu0 0.0
    %323 = vmatpush1.xpose.msra.mxu0 0.0
    %324 = vmatprep.subr.mxu0 0.0
    %325 = vmatpush1.xpose.msra.mxu0 0.0
    %326 = vmatprep.subr.mxu0 0.0
    %327 = vmatpush1.xpose.msra.mxu0 0.0
    %328 = vmatprep.subr.mxu0 0.0
    %329 = vmatpush1.xpose.msra.mxu0 0.0
    %330 = vmatprep.subr.mxu0 0.0
    %331 = vmatpush1.xpose.msra.mxu0 0.0
    %332 = vmatprep.subr.mxu0 0.0
    %333 = vmatpush1.xpose.msra.mxu0 0.0
    %334 = vmatprep.subr.mxu0 0.0
    %335 = vmatpush1.xpose.msra.mxu0 0.0
    %336 = vmatprep.subr.mxu0 0.0
    %337 = vmatpush1.xpose.msra.mxu0 0.0
    %338 = vmatprep.subr.mxu0 0.0
    %339 = vmatpush1.xpose.msra.mxu0 %v306
    %340 = vmatprep.subr.mxu0 0.0
    %341 = vmatpush2.xpose.msra.mxu0 0.0
    %342 = vmatprep.subr.mxu0 0.0
    %343 = vmatpush2.xpose.msra.mxu0 0.0
    %344 = vmatprep.subr.mxu0 0.0
    %345 = vmatpush2.xpose.msra.mxu0 0.0
    %346 = vmatprep.subr.mxu0 0.0
    %347 = vmatpush2.xpose.msra.mxu0 0.0
    %348 = vmatprep.subr.mxu0 0.0
    %349 = vmatpush2.xpose.msra.mxu0 0.0
    %350 = vmatprep.subr.mxu0 0.0
    %351 = vmatpush2.xpose.msra.mxu0 0.0
    %352 = vmatprep.subr.mxu0 0.0
    %353 = vmatpush2.xpose.msra.mxu0 0.0
    %354 = vmatprep.subr.mxu0 0.0
    %355 = vmatpush2.xpose.msra.mxu0 0.0
    %356 = vmatprep.subr.mxu0 0.0
    %357 = vmatpush2.xpose.msra.mxu0 0.0
    %358 = vmatprep.subr.mxu0 0.0
    %359 = vmatpush2.xpose.msra.mxu0 0.0
    %360 = vmatprep.subr.mxu0 0.0
    %361 = vmatpush2.xpose.msra.mxu0 0.0
    %362 = vmatprep.subr.mxu0 0.0
    %363 = vmatpush2.xpose.msra.mxu0 0.0
    %364 = vmatprep.subr.mxu0 0.0
    %365 = vmatpush2.xpose.msra.mxu0 0.0
    %366 = vmatprep.subr.mxu0 0.0
    %367 = vmatpush2.xpose.msra.mxu0 0.0
    %368 = vmatprep.subr.mxu0 0.0
    %369 = vmatpush2.xpose.msra.mxu0 0.0
    %370 = vmatprep.subr.mxu0 0.0
    %371 = vmatpush2.xpose.msra.mxu0 0.0
    %372 = vmatprep.mubr.f32.mxu0 0.0
    %373 = vmatmul.mubr.f32.gmra.mxu0 %v304
    %v374 = vpop.f32.mrf.mxu0
    %v375 = vadd.f32 0.0, %v374
    %v376 = vpop.f32.mrf.mxu0
    %377 = vdwg.mxu0
    %v378 = vsel %vm132, %v375, -1e+30
    %v379 = vsel %vm212, %v378, -inf
    %380 = vmax.xlane.f32.xlu0 %v379
    %v381 = vpop.xlane.xlu0 %380
    %v382 = vsub.f32 %v378, %v381
    %v383 = vmul.f32 %v382, 1.442695
    %v384 = vpow.pop %v383
    %v385 = vsel %vm212, %v384, 0.0
    %386 = vadd.xlane.f32.xlu0 %v385
    %v387 = vpop.xlane.xlu0 %386
    %388 = vrot.lane.b32.xlu0 %v125, 96
    %v389 = vpop.permute.xlu0 %388
    %v392 = vsel %vm212, %v384, 0
    %394 = vmatprep.subr.mxu0 0.0
    %395 = vmatpush1.msra.mxu0 0.0
    %396 = vmatprep.subr.mxu0 0.0
    %397 = vmatpush1.msra.mxu0 0.0
    %398 = vmatprep.subr.mxu0 0.0
    %399 = vmatpush1.msra.mxu0 0.0
    %400 = vmatprep.subr.mxu0 0.0
    %401 = vmatpush1.msra.mxu0 0.0
    %402 = vmatprep.subr.mxu0 0.0
    %403 = vmatpush1.msra.mxu0 0.0
    %404 = vmatprep.subr.mxu0 0.0
    %405 = vmatpush1.msra.mxu0 0.0
    %406 = vmatprep.subr.mxu0 0.0
    %407 = vmatpush1.msra.mxu0 0.0
    %408 = vmatprep.subr.mxu0 0.0
    %409 = vmatpush1.msra.mxu0 0.0
    %410 = vmatprep.subr.mxu0 0.0
    %411 = vmatpush1.msra.mxu0 0.0
    %412 = vmatprep.subr.mxu0 0.0
    %413 = vmatpush1.msra.mxu0 0.0
    %414 = vmatprep.subr.mxu0 0.0
    %415 = vmatpush1.msra.mxu0 0.0
    %416 = vmatprep.subr.mxu0 0.0
    %417 = vmatpush1.msra.mxu0 0.0
    %418 = vmatprep.subr.mxu0 0.0
    %419 = vmatpush1.msra.mxu0 0.0
    %420 = vmatprep.subr.mxu0 0.0
    %421 = vmatpush1.msra.mxu0 0.0
    %422 = vmatprep.subr.mxu0 0.0
    %423 = vmatpush1.msra.mxu0 0.0
    %424 = vmatprep.subr.mxu0 0.0
    %425 = vmatpush1.msra.mxu0 %v389
    %426 = vmatprep.subr.mxu0 0.0
    %427 = vmatpush2.msra.mxu0 0.0
    %428 = vmatprep.subr.mxu0 0.0
    %429 = vmatpush2.msra.mxu0 0.0
    %430 = vmatprep.subr.mxu0 0.0
    %431 = vmatpush2.msra.mxu0 0.0
    %432 = vmatprep.subr.mxu0 0.0
    %433 = vmatpush2.msra.mxu0 0.0
    %434 = vmatprep.subr.mxu0 0.0
    %435 = vmatpush2.msra.mxu0 0.0
    %436 = vmatprep.subr.mxu0 0.0
    %437 = vmatpush2.msra.mxu0 0.0
    %438 = vmatprep.subr.mxu0 0.0
    %439 = vmatpush2.msra.mxu0 0.0
    %440 = vmatprep.subr.mxu0 0.0
    %441 = vmatpush2.msra.mxu0 0.0
    %442 = vmatprep.subr.mxu0 0.0
    %443 = vmatpush2.msra.mxu0 0.0
    %444 = vmatprep.subr.mxu0 0.0
    %445 = vmatpush2.msra.mxu0 0.0
    %446 = vmatprep.subr.mxu0 0.0
    %447 = vmatpush2.msra.mxu0 0.0
    %448 = vmatprep.subr.mxu0 0.0
    %449 = vmatpush2.msra.mxu0 0.0
    %450 = vmatprep.subr.mxu0 0.0
    %451 = vmatpush2.msra.mxu0 0.0
    %452 = vmatprep.subr.mxu0 0.0
    %453 = vmatpush2.msra.mxu0 0.0
    %454 = vmatprep.subr.mxu0 0.0
    %455 = vmatpush2.msra.mxu0 0.0
    %456 = vmatprep.subr.mxu0 0.0
    %457 = vmatpush2.msra.mxu0 0.0
    %458 = vmatprep.mubr.f32.mxu0 0.0
    %459 = vmatmul.mubr.f32.gmra.mxu0 %v392
    %v460 = vpop.f32.mrf.mxu0
    %v461 = vadd.f32 0.0, %v460
    %v462 = vpop.f32.mrf.mxu0
    %463 = vdwg.mxu0
    %v464 = vrcp.pop %v387
    %v465 = vmul.f32 %v461, %v464
    %s466 = scalar_lea.vmem [#allocation7], 8
    %467 = vst.msk [vmem:[%s466] sm:$0xff] %vm136, %v465
    // Predicated region
    $region18: #{tpu_custom_call.1} parent=1 // pred_check
      _
    $region19: #{tpu_custom_call.1} parent=1 // pred_check_branch
      %469 = sbr.rel (0) target = $region21
    $region20: #{tpu_custom_call.1} parent=1 // pred_region
      %s471 = ssub.s32 256, 256
      %472 = vsyncadd [#allocation4], %s471
      %s473 = sshll.u32 [#allocation7], 4
      %s474 = int_to_ptr.vmem [resolvable:$true] %s473
      %479 = dma.vmem_to_hbm [thread:$0]  %s474, 256, %s2, [#allocation4], 128, 128, 8
    $region21: #{tpu_custom_call.1} parent=1 // pred_fallthru
      _
    // Predicated region
    $region22: #{tpu_custom_call.1} parent=1 // pred_check
      _
    $region23: #{tpu_custom_call.1} parent=1 // pred_check_branch
      %481 = sbr.rel (0) target = $region25
    $region24: #{tpu_custom_call.1} parent=1 // pred_region
      %482 = dma.done [#allocation4], 256
    $region25: #{tpu_custom_call.1} parent=1 // pred_fallthru
      _
    %483 = vsyncpa [#allocation3], 1
    %484 = vsyncpa [#allocation6], 1
    %485 = vsyncpa [#allocation4], 1

</llo_original>
